<compile_context>
chip_gen: v7x
topology: tpu7x:2x2x1
jax: 0.10.0
libtpu: 0.0.40
codegen_flags: <defaults>
</compile_context>

<pallas_src>
import jax
import jax.numpy as jnp
from jax.experimental import pallas as pl
from jax.experimental.pallas import tpu as pltpu

# ----------------------------- model config ---------------------------------
B = 2          # batch
L = 128        # sequence length (lane axis inside the kernel)
CIN = 4        # DNA channels (A,C,G,T)
F = 32         # n_filters
KI = 21        # iconv kernel size (padding = 10, "same")
NLAYERS = 4    # residual dilated convs, dilation = 2**(i+1), kernel 3, "same"
TRIM = 48      # trimming; count head pools X[:, trim-37 : L-trim+37]
FLANK = 37     # BPNet count-head flank around the trimmed window

KC = KI * CIN                      # 84  im2col contraction depth
KCP = ((KC + 7) // 8) * 8          # 88  sublane-aligned (zero padded; row KC = bias row)
POOL_S = TRIM - FLANK              # 11
POOL_E = L - TRIM + FLANK          # 117
POOL_W = POOL_E - POOL_S           # 106


def bpnet_count_kernel(x_ref, wic_ref, wrc_ref, brc_ref, head_ref, blin_ref,
                       out_ref):
    """One batch element per grid step.  Lane-dense layout: channels on sublanes,
    sequence L=128 on lanes.

    x_ref    : (1, KCP, L)       im2col'd input (row j = k*CIN + c; row KC is all-ones
                                 so the iconv bias folds into the matmul; rest zero pad)
    wic_ref  : (F, KCP)          iconv weight (+ bias in column KC), packed in wrapper
    wrc_ref  : (NLAYERS, F, 3F)  fused 3-tap residual conv weights
    brc_ref  : (NLAYERS, F, 1)
    head_ref : (F, L)            w_lin[f] * (1/W inside trimmed(+flank) window, else 0)
    blin_ref : (1, 1)            count-head bias
    out_ref  : (1, 8, 128)       count broadcast over one lane-dense tile
    """
    # ---- iconv: ONE fused K=KCP matmul (bias folded in) + ReLU ------------------
    t = jnp.dot(wic_ref[...], x_ref[0], preferred_element_type=jnp.float32)
    t = jnp.maximum(t, 0.0)                                       # (F, L)

    # Lane-index mask helper, built once (hoisted out of the layer loop).
    lane = jax.lax.broadcasted_iota(jnp.int32, (F, L), 1)

    # ---- dilated residual layers: X = X + relu(conv_d(X)) ----------------------
    for i in range(NLAYERS):
        d = 2 ** (i + 1)
        # Tap shifts along the lane axis on the XLU (pltpu.roll) + zero-mask of the
        # wrapped lanes on the VPU — both slots are idle next to the MXU matmuls,
        # and no (L,L) shift matrices have to be streamed from HBM.
        t_left = jnp.where(lane >= d,
                           pltpu.roll(t, d, axis=1), 0.0)         # t[:, l-d], zero OOB
        t_right = jnp.where(lane < L - d,
                            pltpu.roll(t, L - d, axis=1), 0.0)    # t[:, l+d], zero OOB
        x3 = jnp.concatenate([t_left, t, t_right], axis=0)        # (3F, L), aligned concat
        y = jnp.dot(wrc_ref[i], x3,
                    preferred_element_type=jnp.float32)           # fused K=3F conv
        t = t + jnp.maximum(y + brc_ref[i], 0.0)

    # ---- count head: trimmed mean + Linear(F,1) folded into one masked reduction
    contrib = t * head_ref[...]                                   # (F, L)
    pooled = jnp.sum(contrib, axis=1, keepdims=True)              # (F, 1)  lane reduce
    cnt = jnp.sum(pooled, axis=0, keepdims=True) + blin_ref[...]  # (1, 1)
    out_ref[0] = jnp.broadcast_to(cnt, (8, 128))                  # single unmasked store


def make_params(key):
    ks = jax.random.split(key, 6)
    scale = 0.1
    w_ic = scale * jax.random.normal(ks[0], (KI, CIN, F), jnp.float32)
    b_ic = scale * jax.random.normal(ks[1], (1, F), jnp.float32)
    w_rc = scale * jax.random.normal(ks[2], (NLAYERS, 3, F, F), jnp.float32)
    b_rc = scale * jax.random.normal(ks[3], (NLAYERS, 1, F), jnp.float32)
    w_lin = scale * jax.random.normal(ks[4], (F, 1), jnp.float32)
    b_lin = scale * jax.random.normal(ks[5], (1, 1), jnp.float32)
    return w_ic, b_ic, w_rc, b_rc, w_lin, b_lin


@jax.jit
def count_wrapper_forward(X_ncw, w_ic, b_ic, w_rc, b_rc, w_lin, b_lin):
    """CountWrapper.forward(X, X_ctl=None): returns only y_counts, shape (B, 1)."""
    x = X_ncw.astype(jnp.float32)                                # PyTorch NCW (B, CIN, L)

    # -------- wrapper-side packing into lane-dense, aligned operands ------------
    # im2col for the k=21 "same" conv: row j = k*CIN + c holds x[b, c, l + k - 10].
    xp = jnp.pad(x, ((0, 0), (0, 0), (KI // 2, KI // 2)))        # (B, CIN, L+KI-1)
    cols = jnp.stack([xp[:, :, k:k + L] for k in range(KI)], axis=1)  # (B, KI, CIN, L)
    xcol = cols.reshape(B, KC, L)
    xcol = jnp.pad(xcol, ((0, 0), (0, KCP - KC), (0, 0)))        # (B, KCP, L)
    xcol = xcol.at[:, KC, :].set(1.0)                            # ones row -> bias fold

    wic = jnp.pad(w_ic.reshape(KC, F), ((0, KCP - KC), (0, 0)))  # (KCP, F)
    wic = wic.at[KC, :].set(b_ic.reshape(F))                     # bias column
    wic = wic.T                                                  # (F, KCP)

    wrc = jnp.transpose(w_rc.reshape(NLAYERS, 3 * F, F), (0, 2, 1))   # (NLAYERS, F, 3F)
    brc = b_rc.reshape(NLAYERS, F, 1)

    # Count head folded into a single (F, L) factor: w_lin outer 1/W-window-mask.
    lane = jnp.arange(L)
    mrow = jnp.where((lane >= POOL_S) & (lane < POOL_E),
                     1.0 / POOL_W, 0.0).astype(jnp.float32)      # (L,)
    head = w_lin.reshape(F, 1) * mrow[None, :]                   # (F, L)
    blin = b_lin.reshape(1, 1)

    flops = B * 2 * (F * KCP * L + NLAYERS * (F * 3 * F * L) + F * L)
    bytes_acc = 4 * (B * KCP * L + F * KCP + NLAYERS * F * 3 * F
                     + NLAYERS * F + F * L + 1 + B * 8 * 128)

    out = pl.pallas_call(
        bpnet_count_kernel,
        out_shape=jax.ShapeDtypeStruct((B, 8, 128), jnp.float32),
        grid=(B,),
        in_specs=[
            pl.BlockSpec((1, KCP, L), lambda b: (b, 0, 0)),          # xcol (per batch)
            pl.BlockSpec((F, KCP), lambda b: (0, 0)),                # wic (+bias column)
            pl.BlockSpec((NLAYERS, F, 3 * F), lambda b: (0, 0, 0)),  # wrc
            pl.BlockSpec((NLAYERS, F, 1), lambda b: (0, 0, 0)),      # brc
            pl.BlockSpec((F, L), lambda b: (0, 0)),                  # head = wlin * mask/W
            pl.BlockSpec((1, 1), lambda b: (0, 0)),                  # blin
        ],
        out_specs=pl.BlockSpec((1, 8, 128), lambda b: (b, 0, 0)),
        compiler_params=pltpu.CompilerParams(
            dimension_semantics=("parallel",)),                  # v7x: one batch per TC
        cost_estimate=pl.CostEstimate(flops=int(flops), transcendentals=0,
                                      bytes_accessed=int(bytes_acc)),
    )(xcol, wic, wrc, brc, head, blin)
    # TODO(synk): X_ctl (control-track) branch of BPNet's count head is omitted;
    # CountWrapper is exercised here with X_ctl=None.
    return out[:, 0, :1]                                         # (B, 1)


def reference_forward(X_ncw, w_ic, b_ic, w_rc, b_rc, w_lin, b_lin):
    """Pure-JAX reference mirroring the original model math (correctness check)."""
    x = jnp.transpose(X_ncw, (0, 2, 1)).astype(jnp.float32)      # (B, L, CIN)
    xp = jnp.pad(x, ((0, 0), (KI // 2, KI // 2), (0, 0)))
    acc = jnp.zeros((B, L, F), jnp.float32)
    for k in range(KI):
        acc = acc + jnp.einsum('blc,cf->blf', xp[:, k:k + L, :], w_ic[k])
    trunk = jnp.maximum(acc + b_ic, 0.0)
    for i in range(NLAYERS):
        d = 2 ** (i + 1)
        tp = jnp.pad(trunk, ((0, 0), (d, d), (0, 0)))
        y = jnp.zeros((B, L, F), jnp.float32)
        for k in range(3):
            off = d + (k - 1) * d
            y = y + jnp.einsum('blf,fg->blg', tp[:, off:off + L, :], w_rc[i, k])
        trunk = trunk + jnp.maximum(y + b_rc[i], 0.0)
    pooled = jnp.mean(trunk[:, TRIM - FLANK:L - TRIM + FLANK, :], axis=1)
    return pooled @ w_lin + b_lin


if __name__ == "__main__":
    key = jax.random.PRNGKey(0)
    k_x, k_p = jax.random.split(key)
    X = jax.random.normal(k_x, (B, CIN, L), jnp.float32)   # PyTorch NCW input
    params = make_params(k_p)

    y = count_wrapper_forward(X, *params)
    jax.block_until_ready(y)

    y_ref = reference_forward(X, *params)
    assert y.shape == (B, 1)
    assert jnp.allclose(y, y_ref, rtol=1e-4, atol=1e-4), (y, y_ref)
    print("KERNEL_OK")
</pallas_src>

<mosaic_0001>
module attributes {stable_mosaic.version = 11 : i64} {
  func.func @bpnet_count_kernel(%arg0: i32, %arg1: memref<1x88x128xf32, #tpu.memory_space<vmem>>, %arg2: memref<32x88xf32, #tpu.memory_space<vmem>>, %arg3: memref<4x32x96xf32, #tpu.memory_space<vmem>>, %arg4: memref<4x32x1xf32, #tpu.memory_space<vmem>>, %arg5: memref<32x128xf32, #tpu.memory_space<vmem>>, %arg6: memref<1x1xf32, #tpu.memory_space<vmem>>, %arg7: memref<1x8x128xf32, #tpu.memory_space<vmem>>) attributes {dimension_semantics = [#tpu.dimension_semantics<parallel>], iteration_bounds = array<i64: 2>, scalar_prefetch = 0 : i64, scratch_operands = 0 : i64, tpu.core_type = #tpu.core_type<tc>, window_params = [{transform_indices = @transform_0, window_bounds = array<i64: 1, 88, 128>}, {pipeline_mode = #tpu.pipeline_mode<synchronous>, transform_indices = @transform_1, window_bounds = array<i64: 32, 88>}, {pipeline_mode = #tpu.pipeline_mode<synchronous>, transform_indices = @transform_2, window_bounds = array<i64: 4, 32, 96>}, {pipeline_mode = #tpu.pipeline_mode<synchronous>, transform_indices = @transform_3, window_bounds = array<i64: 4, 32, 1>}, {pipeline_mode = #tpu.pipeline_mode<synchronous>, transform_indices = @transform_4, window_bounds = array<i64: 32, 128>}, {pipeline_mode = #tpu.pipeline_mode<synchronous>, transform_indices = @transform_5, window_bounds = array<i64: 1, 1>}, {transform_indices = @transform_6, window_bounds = array<i64: 1, 8, 128>}]} {
    %c0 = arith.constant 0 : index
    %c0_0 = arith.constant 0 : index
    %0 = vector.load %arg2[%c0, %c0_0] : memref<32x88xf32, #tpu.memory_space<vmem>>, vector<32x88xf32>
    %c0_1 = arith.constant 0 : index
    %c0_2 = arith.constant 0 : index
    %c0_3 = arith.constant 0 : index
    %1 = vector.load %arg1[%c0_1, %c0_2, %c0_3] : memref<1x88x128xf32, #tpu.memory_space<vmem>>, vector<1x88x128xf32>
    %2 = vector.shape_cast %1 : vector<1x88x128xf32> to vector<88x128xf32>
    %cst = arith.constant dense<0.000000e+00> : vector<32x128xf32>
    %3 = tpu.matmul %0, %2, %cst {dimension_numbers = #tpu.dot_dimension_numbers<[1], [0], [0], [1], [0, 0, 1, 1], [], []>} : vector<32x88xf32>, vector<88x128xf32>, vector<32x128xf32> -> vector<32x128xf32>
    %cst_4 = arith.constant 0.000000e+00 : f32
    %4 = vector.broadcast %cst_4 : f32 to vector<32x128xf32>
    %5 = arith.maximumf %3, %4 : vector<32x128xf32>
    %6 = tpu.iota {dimensions = array<i32: 1>} : vector<32x128xi32>
    %c2_i32 = arith.constant 2 : i32
    %7 = vector.broadcast %c2_i32 : i32 to vector<32x128xi32>
    %8 = arith.cmpi sge, %6, %7 : vector<32x128xi32>
    %c2_i32_5 = arith.constant 2 : i32
    %9 = tpu.dynamic_rotate %5 by %c2_i32_5 dim 1 : vector<32x128xf32>, i32 -> vector<32x128xf32>
    %cst_6 = arith.constant 0.000000e+00 : f32
    %10 = vector.broadcast %cst_6 : f32 to vector<32x128xf32>
    %11 = arith.select %8, %9, %10 : vector<32x128xi1>, vector<32x128xf32>
    %c126_i32 = arith.constant 126 : i32
    %12 = vector.broadcast %c126_i32 : i32 to vector<32x128xi32>
    %13 = arith.cmpi slt, %6, %12 : vector<32x128xi32>
    %c126_i32_7 = arith.constant 126 : i32
    %14 = tpu.dynamic_rotate %5 by %c126_i32_7 dim 1 : vector<32x128xf32>, i32 -> vector<32x128xf32>
    %cst_8 = arith.constant 0.000000e+00 : f32
    %15 = vector.broadcast %cst_8 : f32 to vector<32x128xf32>
    %16 = arith.select %13, %14, %15 : vector<32x128xi1>, vector<32x128xf32>
    %17 = tpu.concatenate %11, %5, %16 in 0 : vector<32x128xf32>, vector<32x128xf32>, vector<32x128xf32> -> vector<96x128xf32>
    %c0_9 = arith.constant 0 : index
    %c0_10 = arith.constant 0 : index
    %c0_11 = arith.constant 0 : index
    %18 = vector.load %arg3[%c0_9, %c0_10, %c0_11] : memref<4x32x96xf32, #tpu.memory_space<vmem>>, vector<1x32x96xf32>
    %19 = vector.shape_cast %18 : vector<1x32x96xf32> to vector<32x96xf32>
    %cst_12 = arith.constant dense<0.000000e+00> : vector<32x128xf32>
    %20 = tpu.matmul %19, %17, %cst_12 {dimension_numbers = #tpu.dot_dimension_numbers<[1], [0], [0], [1], [0, 0, 1, 1], [], []>} : vector<32x96xf32>, vector<96x128xf32>, vector<32x128xf32> -> vector<32x128xf32>
    %c0_13 = arith.constant 0 : index
    %c0_14 = arith.constant 0 : index
    %c0_15 = arith.constant 0 : index
    %21 = vector.load %arg4[%c0_13, %c0_14, %c0_15] : memref<4x32x1xf32, #tpu.memory_space<vmem>>, vector<1x32x1xf32>
    %22 = vector.shape_cast %21 : vector<1x32x1xf32> to vector<32x1xf32>
    %23 = vector.broadcast %22 : vector<32x1xf32> to vector<32x128xf32>
    %24 = arith.addf %20, %23 : vector<32x128xf32>
    %cst_16 = arith.constant 0.000000e+00 : f32
    %25 = vector.broadcast %cst_16 : f32 to vector<32x128xf32>
    %26 = arith.maximumf %24, %25 : vector<32x128xf32>
    %27 = arith.addf %5, %26 : vector<32x128xf32>
    %c4_i32 = arith.constant 4 : i32
    %28 = vector.broadcast %c4_i32 : i32 to vector<32x128xi32>
    %29 = arith.cmpi sge, %6, %28 : vector<32x128xi32>
    %c4_i32_17 = arith.constant 4 : i32
    %30 = tpu.dynamic_rotate %27 by %c4_i32_17 dim 1 : vector<32x128xf32>, i32 -> vector<32x128xf32>
    %cst_18 = arith.constant 0.000000e+00 : f32
    %31 = vector.broadcast %cst_18 : f32 to vector<32x128xf32>
    %32 = arith.select %29, %30, %31 : vector<32x128xi1>, vector<32x128xf32>
    %c124_i32 = arith.constant 124 : i32
    %33 = vector.broadcast %c124_i32 : i32 to vector<32x128xi32>
    %34 = arith.cmpi slt, %6, %33 : vector<32x128xi32>
    %c124_i32_19 = arith.constant 124 : i32
    %35 = tpu.dynamic_rotate %27 by %c124_i32_19 dim 1 : vector<32x128xf32>, i32 -> vector<32x128xf32>
    %cst_20 = arith.constant 0.000000e+00 : f32
    %36 = vector.broadcast %cst_20 : f32 to vector<32x128xf32>
    %37 = arith.select %34, %35, %36 : vector<32x128xi1>, vector<32x128xf32>
    %38 = tpu.concatenate %32, %27, %37 in 0 : vector<32x128xf32>, vector<32x128xf32>, vector<32x128xf32> -> vector<96x128xf32>
    %c1 = arith.constant 1 : index
    %c0_21 = arith.constant 0 : index
    %c0_22 = arith.constant 0 : index
    %39 = vector.load %arg3[%c1, %c0_21, %c0_22] : memref<4x32x96xf32, #tpu.memory_space<vmem>>, vector<1x32x96xf32>
    %40 = vector.shape_cast %39 : vector<1x32x96xf32> to vector<32x96xf32>
    %cst_23 = arith.constant dense<0.000000e+00> : vector<32x128xf32>
    %41 = tpu.matmul %40, %38, %cst_23 {dimension_numbers = #tpu.dot_dimension_numbers<[1], [0], [0], [1], [0, 0, 1, 1], [], []>} : vector<32x96xf32>, vector<96x128xf32>, vector<32x128xf32> -> vector<32x128xf32>
    %c1_24 = arith.constant 1 : index
    %c0_25 = arith.constant 0 : index
    %c0_26 = arith.constant 0 : index
    %42 = vector.load %arg4[%c1_24, %c0_25, %c0_26] : memref<4x32x1xf32, #tpu.memory_space<vmem>>, vector<1x32x1xf32>
    %43 = vector.shape_cast %42 : vector<1x32x1xf32> to vector<32x1xf32>
    %44 = vector.broadcast %43 : vector<32x1xf32> to vector<32x128xf32>
    %45 = arith.addf %41, %44 : vector<32x128xf32>
    %cst_27 = arith.constant 0.000000e+00 : f32
    %46 = vector.broadcast %cst_27 : f32 to vector<32x128xf32>
    %47 = arith.maximumf %45, %46 : vector<32x128xf32>
    %48 = arith.addf %27, %47 : vector<32x128xf32>
    %c8_i32 = arith.constant 8 : i32
    %49 = vector.broadcast %c8_i32 : i32 to vector<32x128xi32>
    %50 = arith.cmpi sge, %6, %49 : vector<32x128xi32>
    %c8_i32_28 = arith.constant 8 : i32
    %51 = tpu.dynamic_rotate %48 by %c8_i32_28 dim 1 : vector<32x128xf32>, i32 -> vector<32x128xf32>
    %cst_29 = arith.constant 0.000000e+00 : f32
    %52 = vector.broadcast %cst_29 : f32 to vector<32x128xf32>
    %53 = arith.select %50, %51, %52 : vector<32x128xi1>, vector<32x128xf32>
    %c120_i32 = arith.constant 120 : i32
    %54 = vector.broadcast %c120_i32 : i32 to vector<32x128xi32>
    %55 = arith.cmpi slt, %6, %54 : vector<32x128xi32>
    %c120_i32_30 = arith.constant 120 : i32
    %56 = tpu.dynamic_rotate %48 by %c120_i32_30 dim 1 : vector<32x128xf32>, i32 -> vector<32x128xf32>
    %cst_31 = arith.constant 0.000000e+00 : f32
    %57 = vector.broadcast %cst_31 : f32 to vector<32x128xf32>
    %58 = arith.select %55, %56, %57 : vector<32x128xi1>, vector<32x128xf32>
    %59 = tpu.concatenate %53, %48, %58 in 0 : vector<32x128xf32>, vector<32x128xf32>, vector<32x128xf32> -> vector<96x128xf32>
    %c2 = arith.constant 2 : index
    %c0_32 = arith.constant 0 : index
    %c0_33 = arith.constant 0 : index
    %60 = vector.load %arg3[%c2, %c0_32, %c0_33] : memref<4x32x96xf32, #tpu.memory_space<vmem>>, vector<1x32x96xf32>
    %61 = vector.shape_cast %60 : vector<1x32x96xf32> to vector<32x96xf32>
    %cst_34 = arith.constant dense<0.000000e+00> : vector<32x128xf32>
    %62 = tpu.matmul %61, %59, %cst_34 {dimension_numbers = #tpu.dot_dimension_numbers<[1], [0], [0], [1], [0, 0, 1, 1], [], []>} : vector<32x96xf32>, vector<96x128xf32>, vector<32x128xf32> -> vector<32x128xf32>
    %c2_35 = arith.constant 2 : index
    %c0_36 = arith.constant 0 : index
    %c0_37 = arith.constant 0 : index
    %63 = vector.load %arg4[%c2_35, %c0_36, %c0_37] : memref<4x32x1xf32, #tpu.memory_space<vmem>>, vector<1x32x1xf32>
    %64 = vector.shape_cast %63 : vector<1x32x1xf32> to vector<32x1xf32>
    %65 = vector.broadcast %64 : vector<32x1xf32> to vector<32x128xf32>
    %66 = arith.addf %62, %65 : vector<32x128xf32>
    %cst_38 = arith.constant 0.000000e+00 : f32
    %67 = vector.broadcast %cst_38 : f32 to vector<32x128xf32>
    %68 = arith.maximumf %66, %67 : vector<32x128xf32>
    %69 = arith.addf %48, %68 : vector<32x128xf32>
    %c16_i32 = arith.constant 16 : i32
    %70 = vector.broadcast %c16_i32 : i32 to vector<32x128xi32>
    %71 = arith.cmpi sge, %6, %70 : vector<32x128xi32>
    %c16_i32_39 = arith.constant 16 : i32
    %72 = tpu.dynamic_rotate %69 by %c16_i32_39 dim 1 : vector<32x128xf32>, i32 -> vector<32x128xf32>
    %cst_40 = arith.constant 0.000000e+00 : f32
    %73 = vector.broadcast %cst_40 : f32 to vector<32x128xf32>
    %74 = arith.select %71, %72, %73 : vector<32x128xi1>, vector<32x128xf32>
    %c112_i32 = arith.constant 112 : i32
    %75 = vector.broadcast %c112_i32 : i32 to vector<32x128xi32>
    %76 = arith.cmpi slt, %6, %75 : vector<32x128xi32>
    %c112_i32_41 = arith.constant 112 : i32
    %77 = tpu.dynamic_rotate %69 by %c112_i32_41 dim 1 : vector<32x128xf32>, i32 -> vector<32x128xf32>
    %cst_42 = arith.constant 0.000000e+00 : f32
    %78 = vector.broadcast %cst_42 : f32 to vector<32x128xf32>
    %79 = arith.select %76, %77, %78 : vector<32x128xi1>, vector<32x128xf32>
    %80 = tpu.concatenate %74, %69, %79 in 0 : vector<32x128xf32>, vector<32x128xf32>, vector<32x128xf32> -> vector<96x128xf32>
    %c3 = arith.constant 3 : index
    %c0_43 = arith.constant 0 : index
    %c0_44 = arith.constant 0 : index
    %81 = vector.load %arg3[%c3, %c0_43, %c0_44] : memref<4x32x96xf32, #tpu.memory_space<vmem>>, vector<1x32x96xf32>
    %82 = vector.shape_cast %81 : vector<1x32x96xf32> to vector<32x96xf32>
    %cst_45 = arith.constant dense<0.000000e+00> : vector<32x128xf32>
    %83 = tpu.matmul %82, %80, %cst_45 {dimension_numbers = #tpu.dot_dimension_numbers<[1], [0], [0], [1], [0, 0, 1, 1], [], []>} : vector<32x96xf32>, vector<96x128xf32>, vector<32x128xf32> -> vector<32x128xf32>
    %c3_46 = arith.constant 3 : index
    %c0_47 = arith.constant 0 : index
    %c0_48 = arith.constant 0 : index
    %84 = vector.load %arg4[%c3_46, %c0_47, %c0_48] : memref<4x32x1xf32, #tpu.memory_space<vmem>>, vector<1x32x1xf32>
    %85 = vector.shape_cast %84 : vector<1x32x1xf32> to vector<32x1xf32>
    %86 = vector.broadcast %85 : vector<32x1xf32> to vector<32x128xf32>
    %87 = arith.addf %83, %86 : vector<32x128xf32>
    %cst_49 = arith.constant 0.000000e+00 : f32
    %88 = vector.broadcast %cst_49 : f32 to vector<32x128xf32>
    %89 = arith.maximumf %87, %88 : vector<32x128xf32>
    %90 = arith.addf %69, %89 : vector<32x128xf32>
    %c0_50 = arith.constant 0 : index
    %c0_51 = arith.constant 0 : index
    %91 = vector.load %arg5[%c0_50, %c0_51] : memref<32x128xf32, #tpu.memory_space<vmem>>, vector<32x128xf32>
    %92 = arith.mulf %90, %91 : vector<32x128xf32>
    %cst_52 = arith.constant dense<0.000000e+00> : vector<32xf32>
    %93 = vector.multi_reduction <add>, %92, %cst_52 [1] : vector<32x128xf32> to vector<32xf32>
    %94 = vector.shape_cast %93 : vector<32xf32> to vector<32x1xf32>
    %cst_53 = arith.constant dense<0.000000e+00> : vector<1xf32>
    %95 = vector.multi_reduction <add>, %94, %cst_53 [0] : vector<32x1xf32> to vector<1xf32>
    %96 = vector.shape_cast %95 : vector<1xf32> to vector<1x1xf32>
    %c0_54 = arith.constant 0 : index
    %c0_55 = arith.constant 0 : index
    %97 = vector.load %arg6[%c0_54, %c0_55] : memref<1x1xf32, #tpu.memory_space<vmem>>, vector<1x1xf32>
    %98 = arith.addf %96, %97 : vector<1x1xf32>
    %99 = vector.shape_cast %98 : vector<1x1xf32> to vector<1x1xf32>
    %100 = vector.broadcast %99 : vector<1x1xf32> to vector<8x128xf32>
    %c0_56 = arith.constant 0 : index
    %c0_57 = arith.constant 0 : index
    %c0_58 = arith.constant 0 : index
    %101 = vector.load %arg7[%c0_56, %c0_57, %c0_58] : memref<1x8x128xf32, #tpu.memory_space<vmem>>, vector<1x8x128xf32>
    %102 = vector.shape_cast %101 : vector<1x8x128xf32> to vector<8x128xf32>
    %103 = vector.shape_cast %100 : vector<8x128xf32> to vector<1x8x128xf32>
    tpu.vector_store %arg7[%c0_56, %c0_57, %c0_58], %103 {strides = array<i32>} : memref<1x8x128xf32, #tpu.memory_space<vmem>>, vector<1x8x128xf32>,
    return
  }
  func.func @transform_0(%arg0: i32) -> (i32, i32, i32) {
    %c0_i32 = arith.constant 0 : i32
    %c0_i32_0 = arith.constant 0 : i32
    %c0_i32_1 = arith.constant 0 : i32
    return %arg0, %c0_i32, %c0_i32_0 : i32, i32, i32
  }
  func.func @transform_1(%arg0: i32) -> (i32, i32) {
    %c0_i32 = arith.constant 0 : i32
    %c0_i32_0 = arith.constant 0 : i32
    %c0_i32_1 = arith.constant 0 : i32
    return %c0_i32, %c0_i32_0 : i32, i32
  }
  func.func @transform_2(%arg0: i32) -> (i32, i32, i32) {
    %c0_i32 = arith.constant 0 : i32
    %c0_i32_0 = arith.constant 0 : i32
    %c0_i32_1 = arith.constant 0 : i32
    %c0_i32_2 = arith.constant 0 : i32
    return %c0_i32, %c0_i32_0, %c0_i32_1 : i32, i32, i32
  }
  func.func @transform_3(%arg0: i32) -> (i32, i32, i32) {
    %c0_i32 = arith.constant 0 : i32
    %c0_i32_0 = arith.constant 0 : i32
    %c0_i32_1 = arith.constant 0 : i32
    %c0_i32_2 = arith.constant 0 : i32
    return %c0_i32, %c0_i32_0, %c0_i32_1 : i32, i32, i32
  }
  func.func @transform_4(%arg0: i32) -> (i32, i32) {
    %c0_i32 = arith.constant 0 : i32
    %c0_i32_0 = arith.constant 0 : i32
    %c0_i32_1 = arith.constant 0 : i32
    return %c0_i32, %c0_i32_0 : i32, i32
  }
  func.func @transform_5(%arg0: i32) -> (i32, i32) {
    %c0_i32 = arith.constant 0 : i32
    %c0_i32_0 = arith.constant 0 : i32
    %c0_i32_1 = arith.constant 0 : i32
    return %c0_i32, %c0_i32_0 : i32, i32
  }
  func.func @transform_6(%arg0: i32) -> (i32, i32, i32) {
    %c0_i32 = arith.constant 0 : i32
    %c0_i32_0 = arith.constant 0 : i32
    %c0_i32_1 = arith.constant 0 : i32
    return %arg0, %c0_i32, %c0_i32_0 : i32, i32, i32
  }
}

</mosaic_0001>

<llo_original>
// kernel: count_wrapper_forward.1
$region0: #{count_wrapper_forward.1}
  #allocation0 [shape = 'u32[]', space=smem, size = 0x4, offset = 0x4, fixed_abs, tag = 'smem constant byte address 0x4 - core index']
  #allocation1 [shape = 'u32[144,128]{1,0:T(1,128)}', space=vmem, size = 0x12000, scoped, tag = 'internal scratch']
  #allocation2 [shape = 'f32[1,1]{1,0:T(1,128)S(1)}', space=vmem, size = 0x200, scoped, tag = 'scoped memory for count_wrapper_forward.1']
  %s0 = inlined_call_operand.vmem [shape: f32[2,88,128], index: 0, kind: input, shape index: {}]
  %s1 = inlined_call_operand.vmem [shape: f32[32,88], index: 1, kind: input, shape index: {}]
  %s2 = inlined_call_operand.vmem [shape: f32[4,32,96], index: 2, kind: input, shape index: {}]
  %s3 = inlined_call_operand.vmem [shape: f32[4,32,1], index: 3, kind: input, shape index: {}]
  %s4 = inlined_call_operand.vmem [shape: f32[32,128], index: 4, kind: input, shape index: {}]
  %s5 = inlined_call_operand.<no memory space> [shape: f32[1,1], index: 5, kind: input, shape index: {}]
  %s6 = inlined_call_operand.vmem [shape: f32[2,8,128], index: 6, kind: output, shape index: {}]
  %s7 = sld [smem:[#allocation0]]
  $region57: #{count_wrapper_forward.1} parent=0
    _
  %s9 = ssub.s32 1, %s7
  %s10 = scalar_select 0, %s9, %s7
  %v11 = vstv %s5
  %12 = vst [vmem:[#allocation2] sm:$0x1] %v11
  loop: start=0, step=1, limit=4
  $region2: #{count_wrapper_forward.1} parent=0 // loop_pre_header
    _
  $region3: #{count_wrapper_forward.1} parent=0 // loop_header
    %s14 = sphi 0, %s18
    %p15 = scmp.ge.s32.totalorder %s14, 4
    %s24 = sphi 0, %s26
    %s27 = sphi 0, %s24
    %s28 = sphi 0, %s27
    %s44 = sphi 0, %s28
    %s48 = sphi 0, %s48
    %s50 = sphi 0, %s48
    %s51 = sphi 0, %s50
    %s65 = sphi 0, %s51
    %s69 = sphi 0, %s69
    %s71 = sphi 0, %s69
    %s72 = sphi 0, %s71
    %s86 = sphi 0, %s72
    %s90 = sphi 0, %s90
    %s92 = sphi 0, %s90
    %s93 = sphi 0, %s92
    %s107 = sphi 0, %s93
    %s111 = sphi 0, %s111
    %s113 = sphi 0, %s111
    %s114 = sphi 0, %s113
    %s128 = sphi 0, %s114
    %s132 = sphi 0, %s132
    %s134 = sphi 0, %s132
    %s135 = sphi 0, %s134
    %s149 = sphi 0, %s135
    %s155 = sphi 0, %s157
    %s158 = sphi 0, %s155
    %s159 = sphi 0, %s158
    %s175 = sphi 0, %s159
  $region4: #{count_wrapper_forward.1} parent=0 // loop_header_branch
    %17 = sbr.rel (%p15) target = $region8
  $region5: #{count_wrapper_forward.1} parent=0 // loop_body
    %s19 = ssub.s32 %s14, 1
    %s20 = ssub.s32 %s14, 2
    %s21 = sadd.s32 %s14, 1
    %s22 = ssub.s32 %s14, %s21
    %p23 = scmp.eq.s32.totalorder %s22, 0
    %s25 = sadd.s32 %s24, 1
    %s26 = scalar_select %p23, %s24, %s25
    %p29 = pneg %p23
    %p30 = scmp.eq.s32.totalorder %s14, 1
    %p31 = por %p29, %p30
    %p32 = scmp.ne.s32.totalorder %s24, %s27
    %p33 = scmp.eq.s32.totalorder %s14, 0
    %p34 = por %p32, %p33
    %p35 = scmp.ne.s32.totalorder %s24, %s27
    %p36 = scmp.eq.s32.totalorder %s19, 1
    %p37 = por %p35, %p36
    %p38 = scmp.ne.s32.totalorder %s27, %s28
    %p39 = scmp.eq.s32.totalorder %s19, 0
    %p40 = por %p38, %p39
    %p41 = scmp.ne.s32.totalorder %s27, %s28
    %p42 = scmp.eq.s32.totalorder %s20, 1
    %p43 = por %p41, %p42
    %p45 = scmp.ne.s32.totalorder %s28, %s44
    %p46 = scmp.eq.s32.totalorder %s20, 0
    %p47 = por %p45, %p46
    %s49 = sadd.s32 %s48, 1
    %p52 = scmp.eq.s32.totalorder %s14, 1
    %p53 = scmp.ne.s32.totalorder %s48, %s50
    %p54 = scmp.eq.s32.totalorder %s14, 0
    %p55 = por %p53, %p54
    %p56 = scmp.ne.s32.totalorder %s48, %s50
    %p57 = scmp.eq.s32.totalorder %s19, 1
    %p58 = por %p56, %p57
    %p59 = scmp.ne.s32.totalorder %s50, %s51
    %p60 = scmp.eq.s32.totalorder %s19, 0
    %p61 = por %p59, %p60
    %p62 = scmp.ne.s32.totalorder %s50, %s51
    %p63 = scmp.eq.s32.totalorder %s20, 1
    %p64 = por %p62, %p63
    %p66 = scmp.ne.s32.totalorder %s51, %s65
    %p67 = scmp.eq.s32.totalorder %s20, 0
    %p68 = por %p66, %p67
    %s70 = sadd.s32 %s69, 1
    %p73 = scmp.eq.s32.totalorder %s14, 1
    %p74 = scmp.ne.s32.totalorder %s69, %s71
    %p75 = scmp.eq.s32.totalorder %s14, 0
    %p76 = por %p74, %p75
    %p77 = scmp.ne.s32.totalorder %s69, %s71
    %p78 = scmp.eq.s32.totalorder %s19, 1
    %p79 = por %p77, %p78
    %p80 = scmp.ne.s32.totalorder %s71, %s72
    %p81 = scmp.eq.s32.totalorder %s19, 0
    %p82 = por %p80, %p81
    %p83 = scmp.ne.s32.totalorder %s71, %s72
    %p84 = scmp.eq.s32.totalorder %s20, 1
    %p85 = por %p83, %p84
    %p87 = scmp.ne.s32.totalorder %s72, %s86
    %p88 = scmp.eq.s32.totalorder %s20, 0
    %p89 = por %p87, %p88
    %s91 = sadd.s32 %s90, 1
    %p94 = scmp.eq.s32.totalorder %s14, 1
    %p95 = scmp.ne.s32.totalorder %s90, %s92
    %p96 = scmp.eq.s32.totalorder %s14, 0
    %p97 = por %p95, %p96
    %p98 = scmp.ne.s32.totalorder %s90, %s92
    %p99 = scmp.eq.s32.totalorder %s19, 1
    %p100 = por %p98, %p99
    %p101 = scmp.ne.s32.totalorder %s92, %s93
    %p102 = scmp.eq.s32.totalorder %s19, 0
    %p103 = por %p101, %p102
    %p104 = scmp.ne.s32.totalorder %s92, %s93
    %p105 = scmp.eq.s32.totalorder %s20, 1
    %p106 = por %p104, %p105
    %p108 = scmp.ne.s32.totalorder %s93, %s107
    %p109 = scmp.eq.s32.totalorder %s20, 0
    %p110 = por %p108, %p109
    %s112 = sadd.s32 %s111, 1
    %p115 = scmp.eq.s32.totalorder %s14, 1
    %p116 = scmp.ne.s32.totalorder %s111, %s113
    %p117 = scmp.eq.s32.totalorder %s14, 0
    %p118 = por %p116, %p117
    %p119 = scmp.ne.s32.totalorder %s111, %s113
    %p120 = scmp.eq.s32.totalorder %s19, 1
    %p121 = por %p119, %p120
    %p122 = scmp.ne.s32.totalorder %s113, %s114
    %p123 = scmp.eq.s32.totalorder %s19, 0
    %p124 = por %p122, %p123
    %p125 = scmp.ne.s32.totalorder %s113, %s114
    %p126 = scmp.eq.s32.totalorder %s20, 1
    %p127 = por %p125, %p126
    %p129 = scmp.ne.s32.totalorder %s114, %s128
    %p130 = scmp.eq.s32.totalorder %s20, 0
    %p131 = por %p129, %p130
    %s133 = sadd.s32 %s132, 1
    %p136 = scmp.eq.s32.totalorder %s14, 1
    %p137 = scmp.ne.s32.totalorder %s132, %s134
    %p138 = scmp.eq.s32.totalorder %s14, 0
    %p139 = por %p137, %p138
    %p140 = scmp.ne.s32.totalorder %s132, %s134
    %p141 = scmp.eq.s32.totalorder %s19, 1
    %p142 = por %p140, %p141
    %p143 = scmp.ne.s32.totalorder %s134, %s135
    %p144 = scmp.eq.s32.totalorder %s19, 0
    %p145 = por %p143, %p144
    %p146 = scmp.ne.s32.totalorder %s134, %s135
    %p147 = scmp.eq.s32.totalorder %s20, 1
    %p148 = por %p146, %p147
    %p150 = scmp.ne.s32.totalorder %s135, %s149
    %p151 = scmp.eq.s32.totalorder %s20, 0
    %p152 = por %p150, %p151
    %s153 = ssub.s32 %s14, %s21
    %p154 = scmp.eq.s32.totalorder %s153, 0
    %s156 = sadd.s32 %s155, 1
    %s157 = scalar_select %p154, %s155, %s156
    %p160 = pneg %p154
    %p161 = scmp.eq.s32.totalorder %s14, 1
    %p162 = por %p160, %p161
    %p163 = scmp.ne.s32.totalorder %s155, %s158
    %p164 = scmp.eq.s32.totalorder %s14, 0
    %p165 = por %p163, %p164
    %p166 = scmp.ne.s32.totalorder %s155, %s158
    %p167 = scmp.eq.s32.totalorder %s19, 1
    %p168 = por %p166, %p167
    %p169 = scmp.ne.s32.totalorder %s158, %s159
    %p170 = scmp.eq.s32.totalorder %s19, 0
    %p171 = por %p169, %p170
    %p172 = scmp.ne.s32.totalorder %s158, %s159
    %p173 = scmp.eq.s32.totalorder %s20, 1
    %p174 = por %p172, %p173
    %p176 = scmp.ne.s32.totalorder %s159, %s175
    %p177 = scmp.eq.s32.totalorder %s20, 0
    %p178 = por %p176, %p177
    %p179 = scmp.le.s32.totalorder 1, %s14
    %p180 = scmp.lt.s32.totalorder %s14, 3
    %p181 = pnand %p179, %p180
    %p182 = pneg %p181
    // Predicated region
    $region9: #{count_wrapper_forward.1} parent=5 // pred_check
      _
    $region10: #{count_wrapper_forward.1} parent=5 // pred_check_branch
      %184 = sbr.rel (%p181) target = $region12
    $region11: #{count_wrapper_forward.1} parent=5 // pred_region
      %s185 = ssub.s32 %s14, 1
      // Predicated region
      $region13: #{count_wrapper_forward.1} parent=11 // pred_check
        %p186 = pneg %p61
      $region14: #{count_wrapper_forward.1} parent=11 // pred_check_branch
        %188 = sbr.rel (%p186) target = $region16
      $region15: #{count_wrapper_forward.1} parent=11 // pred_region
        _
      $region16: #{count_wrapper_forward.1} parent=11 // pred_fallthru
        _
      // Predicated region
      $region17: #{count_wrapper_forward.1} parent=11 // pred_check
        %p189 = pneg %p82
      $region18: #{count_wrapper_forward.1} parent=11 // pred_check_branch
        %191 = sbr.rel (%p189) target = $region20
      $region19: #{count_wrapper_forward.1} parent=11 // pred_region
        _
      $region20: #{count_wrapper_forward.1} parent=11 // pred_fallthru
        _
      // Predicated region
      $region21: #{count_wrapper_forward.1} parent=11 // pred_check
        %p192 = pneg %p103
      $region22: #{count_wrapper_forward.1} parent=11 // pred_check_branch
        %194 = sbr.rel (%p192) target = $region24
      $region23: #{count_wrapper_forward.1} parent=11 // pred_region
        _
      $region24: #{count_wrapper_forward.1} parent=11 // pred_fallthru
        _
      // Predicated region
      $region25: #{count_wrapper_forward.1} parent=11 // pred_check
        %p195 = pneg %p124
      $region26: #{count_wrapper_forward.1} parent=11 // pred_check_branch
        %197 = sbr.rel (%p195) target = $region28
      $region27: #{count_wrapper_forward.1} parent=11 // pred_region
        _
      $region28: #{count_wrapper_forward.1} parent=11 // pred_fallthru
        _
      // Predicated region
      $region29: #{count_wrapper_forward.1} parent=11 // pred_check
        %p198 = pneg %p145
      $region30: #{count_wrapper_forward.1} parent=11 // pred_check_branch
        %200 = sbr.rel (%p198) target = $region32
      $region31: #{count_wrapper_forward.1} parent=11 // pred_region
        _
      $region32: #{count_wrapper_forward.1} parent=11 // pred_fallthru
        _
    $region12: #{count_wrapper_forward.1} parent=5 // pred_fallthru
      _
    %p201 = scmp.lt.s32.totalorder %s14, 2
    // Predicated region
    $region33: #{count_wrapper_forward.1} parent=5 // pred_check
      %p202 = pneg %p201
    $region34: #{count_wrapper_forward.1} parent=5 // pred_check_branch
      %204 = sbr.rel (%p202) target = $region36
    $region35: #{count_wrapper_forward.1} parent=5 // pred_region
      // Predicated region
      $region37: #{count_wrapper_forward.1} parent=35 // pred_check
        %p205 = pneg %p34
      $region38: #{count_wrapper_forward.1} parent=35 // pred_check_branch
        %207 = sbr.rel (%p205) target = $region40
      $region39: #{count_wrapper_forward.1} parent=35 // pred_region
        %p208 = scmp.lt.s32.totalorder %s14, 1
        %s209 = scalar_select %p208, %s14, 1
        %s210 = smul.addr %s209, 11
        %s211 = smul.addr %s210, 8
        %s212 = scalar_lea.vmem %s0, %s211
      $region40: #{count_wrapper_forward.1} parent=35 // pred_fallthru
        _
    $region36: #{count_wrapper_forward.1} parent=5 // pred_fallthru
      _
    %p213 = scmp.le.s32.totalorder 1, %s14
    %p214 = scmp.lt.s32.totalorder %s14, 3
    %p215 = pnand %p213, %p214
    %p216 = pneg %p215
    // Predicated region
    $region41: #{count_wrapper_forward.1} parent=5 // pred_check
      _
    $region42: #{count_wrapper_forward.1} parent=5 // pred_check_branch
      %218 = sbr.rel (%p215) target = $region44
    $region43: #{count_wrapper_forward.1} parent=5 // pred_region
      %s219 = ssub.s32 %s14, 1
      %p220 = scmp.lt.s32.totalorder %s19, 1
      %s221 = scalar_select %p220, %s19, 1
      %s222 = smul.addr %s221, 11
      %s223 = smul.addr %s222, 8
      %s224 = scalar_lea.vmem %s0, %s223
      %p225 = pneg %p40
      %p226 = pneg %p37
      %p227 = pneg %p61
      %p228 = pneg %p58
      %p229 = pneg %p82
      %p230 = pneg %p79
      %p231 = pneg %p103
      %p232 = pneg %p100
      %p233 = pneg %p124
      %p234 = pneg %p121
      %p235 = pneg %p145
      %p236 = pneg %p142
      %p237 = pneg %p171
      %p238 = pneg %p168
      %p239 = scmp.lt.s32.totalorder %s19, 1
      %s240 = scalar_select %p239, %s19, 1
      %s241 = smul.addr %s240, 8
      %s242 = scalar_lea.vmem %s6, %s241
      %p243 = scmp.lt.s32.totalorder %s19, 1
      %s244 = scalar_select %p243, %s19, 1
      %s245 = smul.addr %s244, 11
      %s246 = smul.addr %s245, 8
      %s247 = scalar_lea.vmem %s0, %s246
      %p248 = scmp.lt.s32.totalorder %s19, 1
      %s249 = scalar_select %p248, %s19, 1
      %s250 = smul.addr %s249, 8
      %s251 = scalar_lea.vmem %s6, %s250
      %v252 = vld [vmem:[%s1] sm:$0xff]
      %v253 = vld [vmem:[%s1 + $0x8] sm:$0xff]
      %v254 = vld [vmem:[%s1 + $0x10] sm:$0xff]
      %v255 = vld [vmem:[%s1 + $0x18] sm:$0xff]
      %v256 = vld [vmem:[%s247] sm:$0xff]
      %v257 = vld [vmem:[%s247 + $0x8] sm:$0xff]
      %v258 = vld [vmem:[%s247 + $0x10] sm:$0xff]
      %v259 = vld [vmem:[%s247 + $0x18] sm:$0xff]
      %v260 = vld [vmem:[%s247 + $0x20] sm:$0xff]
      %v261 = vld [vmem:[%s247 + $0x28] sm:$0xff]
      %v262 = vld [vmem:[%s247 + $0x30] sm:$0xff]
      %v263 = vld [vmem:[%s247 + $0x38] sm:$0xff]
      %v264 = vld [vmem:[%s247 + $0x40] sm:$0xff]
      %v265 = vld [vmem:[%s247 + $0x48] sm:$0xff]
      %v266 = vld [vmem:[%s247 + $0x50] sm:$0xff]
      %vm267 = vcmask 719872
      %v269 = vsel %vm267, %v252, 0
      %v272 = vsel %vm267, %v253, 0
      %v275 = vsel %vm267, %v254, 0
      %v278 = vsel %vm267, %v255, 0
      %280 = vmatprep.subr.mxu0 0.0
      %281 = vmatpush1.msra.mxu0 %v256
      %282 = vmatprep.subr.mxu0 0.0
      %283 = vmatpush1.msra.mxu0 %v257
      %284 = vmatprep.subr.mxu0 0.0
      %285 = vmatpush1.msra.mxu0 %v258
      %286 = vmatprep.subr.mxu0 0.0
      %287 = vmatpush1.msra.mxu0 %v259
      %288 = vmatprep.subr.mxu0 0.0
      %289 = vmatpush1.msra.mxu0 %v260
      %290 = vmatprep.subr.mxu0 0.0
      %291 = vmatpush1.msra.mxu0 %v261
      %292 = vmatprep.subr.mxu0 0.0
      %293 = vmatpush1.msra.mxu0 %v262
      %294 = vmatprep.subr.mxu0 0.0
      %295 = vmatpush1.msra.mxu0 %v263
      %296 = vmatprep.subr.mxu0 0.0
      %297 = vmatpush1.msra.mxu0 %v264
      %298 = vmatprep.subr.mxu0 0.0
      %299 = vmatpush1.msra.mxu0 %v265
      %300 = vmatprep.subr.mxu0 0.0
      %301 = vmatpush1.msra.mxu0 %v266
      %302 = vmatprep.subr.mxu0 0.0
      %303 = vmatpush1.msra.mxu0 0.0
      %304 = vmatprep.subr.mxu0 0.0
      %305 = vmatpush1.msra.mxu0 0.0
      %306 = vmatprep.subr.mxu0 0.0
      %307 = vmatpush1.msra.mxu0 0.0
      %308 = vmatprep.subr.mxu0 0.0
      %309 = vmatpush1.msra.mxu0 0.0
      %310 = vmatprep.subr.mxu0 0.0
      %311 = vmatpush1.msra.mxu0 0.0
      %312 = vmatprep.subr.mxu0 0.0
      %313 = vmatpush1.msra.mxu0 0.0
      %314 = vmatprep.subr.mxu0 0.0
      %315 = vmatpush1.msra.mxu0 0.0
      %316 = vmatprep.subr.mxu0 0.0
      %317 = vmatpush1.msra.mxu0 0.0
      %318 = vmatprep.subr.mxu0 0.0
      %319 = vmatpush1.msra.mxu0 0.0
      %320 = vmatprep.subr.mxu0 0.0
      %321 = vmatpush1.msra.mxu0 0.0
      %322 = vmatprep.subr.mxu0 0.0
      %323 = vmatpush1.msra.mxu0 0.0
      %324 = vmatprep.subr.mxu0 0.0
      %325 = vmatpush1.msra.mxu0 0.0
      %326 = vmatprep.subr.mxu0 0.0
      %327 = vmatpush1.msra.mxu0 0.0
      %328 = vmatprep.subr.mxu0 0.0
      %329 = vmatpush1.msra.mxu0 0.0
      %330 = vmatprep.subr.mxu0 0.0
      %331 = vmatpush1.msra.mxu0 0.0
      %332 = vmatprep.subr.mxu0 0.0
      %333 = vmatpush1.msra.mxu0 0.0
      %334 = vmatprep.subr.mxu0 0.0
      %335 = vmatpush1.msra.mxu0 0.0
      %336 = vmatprep.subr.mxu0 0.0
      %337 = vmatpush1.msra.mxu0 0.0
      %338 = vmatprep.subr.mxu0 0.0
      %339 = vmatpush1.msra.mxu0 0.0
      %340 = vmatprep.subr.mxu0 0.0
      %341 = vmatpush1.msra.mxu0 0.0
      %342 = vmatprep.subr.mxu0 0.0
      %343 = vmatpush1.msra.mxu0 0.0
      %344 = vmatprep.mubr.f32.mxu0 0.0
      %345 = vmatmul.mubr.f32.gmra.mrb[0].mxu0 %v269
      %v346 = vpop.f32.mrb[0].mxu0
      %v347 = vadd.f32 0.0, %v346
      %v348 = vpop.f32.mrb[0].mxu0
      %349 = vmatprep.mubr.f32.mxu0 0.0
      %350 = vmatmul.mubr.f32.gmra.mrb[0].mxu0 %v272
      %v351 = vpop.f32.mrb[0].mxu0
      %v352 = vadd.f32 0.0, %v351
      %v353 = vpop.f32.mrb[0].mxu0
      %354 = vmatprep.mubr.f32.mxu0 0.0
      %355 = vmatmul.mubr.f32.gmra.mrb[0].mxu0 %v275
      %v356 = vpop.f32.mrb[0].mxu0
      %v357 = vadd.f32 0.0, %v356
      %v358 = vpop.f32.mrb[0].mxu0
      %359 = vmatprep.mubr.f32.mxu0 0.0
      %360 = vmatmul.mubr.f32.gmra.mrb[0].mxu0 %v278
      %v361 = vpop.f32.mrb[0].mxu0
      %v362 = vadd.f32 0.0, %v361
      %v363 = vpop.f32.mrb[0].mxu0
      %364 = vdwg.mxu0
      %v365 = vmax.f32 %v347, 0.0
      %v366 = vmax.f32 %v352, 0.0
      %v367 = vmax.f32 %v357, 0.0
      %v368 = vmax.f32 %v362, 0.0
      %v369 = vlaneseq
      %v370 = vand.u32 %v369, 127
      %vm371 = vcmp.ge.s32.totalorder %v370, 2
      %372 = vrot.lane.b32.xlu0 %v365, 2
      %v373 = vpop.permute.xlu0 %372
      %374 = vrot.lane.b32.xlu0 %v366, 2
      %v375 = vpop.permute.xlu0 %374
      %376 = vrot.lane.b32.xlu0 %v367, 2
      %v377 = vpop.permute.xlu0 %376
      %378 = vrot.lane.b32.xlu0 %v368, 2
      %v379 = vpop.permute.xlu0 %378
      %v380 = vsel %vm371, %v373, 0.0
      %v381 = vsel %vm371, %v375, 0.0
      %v382 = vsel %vm371, %v377, 0.0
      %v383 = vsel %vm371, %v379, 0.0
      %vm384 = vcmp.lt.s32.totalorder %v370, 126
      %385 = vrot.lane.b32.xlu0 %v365, 126
      %v386 = vpop.permute.xlu0 %385
      %387 = vrot.lane.b32.xlu0 %v366, 126
      %v388 = vpop.permute.xlu0 %387
      %389 = vrot.lane.b32.xlu0 %v367, 126
      %v390 = vpop.permute.xlu0 %389
      %391 = vrot.lane.b32.xlu0 %v368, 126
      %v392 = vpop.permute.xlu0 %391
      %v393 = vsel %vm384, %v386, 0.0
      %v394 = vsel %vm384, %v388, 0.0
      %v395 = vsel %vm384, %v390, 0.0
      %v396 = vsel %vm384, %v392, 0.0
      %v397 = vld [vmem:[%s2] sm:$0xff]
      %v398 = vld [vmem:[%s2 + $0x8] sm:$0xff]
      %v399 = vld [vmem:[%s2 + $0x10] sm:$0xff]
      %v400 = vld [vmem:[%s2 + $0x18] sm:$0xff]
      %v401 = vld [vmem:[%s3] sm:$0xff]
      %v402 = vld [vmem:[%s3 + $0x8] sm:$0xff]
      %v403 = vld [vmem:[%s3 + $0x10] sm:$0xff]
      %v404 = vld [vmem:[%s3 + $0x18] sm:$0xff]
      %406 = vset.pattern.permute.xlu0 0
      %407 = vperm.xlu0 %406, %v401
      %v408 = vpop.permute.xlu0 %407
      %411 = vset.pattern.permute.xlu0 0
      %412 = vperm.xlu0 %411, %v402
      %v413 = vpop.permute.xlu0 %412
      %416 = vset.pattern.permute.xlu0 0
      %417 = vperm.xlu0 %416, %v403
      %v418 = vpop.permute.xlu0 %417
      %421 = vset.pattern.permute.xlu0 0
      %422 = vperm.xlu0 %421, %v404
      %v423 = vpop.permute.xlu0 %422
      %vm425 = vcmask 785408
      %v427 = vsel %vm425, %v397, 0
      %v430 = vsel %vm425, %v398, 0
      %v433 = vsel %vm425, %v399, 0
      %v436 = vsel %vm425, %v400, 0
      %438 = vmatprep.subr.mxu0 0.0
      %439 = vmatpush1.msra.mxu0 %v380
      %440 = vmatprep.subr.mxu0 0.0
      %441 = vmatpush1.msra.mxu0 %v381
      %442 = vmatprep.subr.mxu0 0.0
      %443 = vmatpush1.msra.mxu0 %v382
      %444 = vmatprep.subr.mxu0 0.0
      %445 = vmatpush1.msra.mxu0 %v383
      %446 = vmatprep.subr.mxu0 0.0
      %447 = vmatpush1.msra.mxu0 %v365
      %448 = vmatprep.subr.mxu0 0.0
      %449 = vmatpush1.msra.mxu0 %v366
      %450 = vmatprep.subr.mxu0 0.0
      %451 = vmatpush1.msra.mxu0 %v367
      %452 = vmatprep.subr.mxu0 0.0
      %453 = vmatpush1.msra.mxu0 %v368
      %454 = vmatprep.subr.mxu0 0.0
      %455 = vmatpush1.msra.mxu0 %v393
      %456 = vmatprep.subr.mxu0 0.0
      %457 = vmatpush1.msra.mxu0 %v394
      %458 = vmatprep.subr.mxu0 0.0
      %459 = vmatpush1.msra.mxu0 %v395
      %460 = vmatprep.subr.mxu0 0.0
      %461 = vmatpush1.msra.mxu0 %v396
      %462 = vmatprep.subr.mxu0 0.0
      %463 = vmatpush1.msra.mxu0 0.0
      %464 = vmatprep.subr.mxu0 0.0
      %465 = vmatpush1.msra.mxu0 0.0
      %466 = vmatprep.subr.mxu0 0.0
      %467 = vmatpush1.msra.mxu0 0.0
      %468 = vmatprep.subr.mxu0 0.0
      %469 = vmatpush1.msra.mxu0 0.0
      %470 = vmatprep.subr.mxu0 0.0
      %471 = vmatpush1.msra.mxu0 0.0
      %472 = vmatprep.subr.mxu0 0.0
      %473 = vmatpush1.msra.mxu0 0.0
      %474 = vmatprep.subr.mxu0 0.0
      %475 = vmatpush1.msra.mxu0 0.0
      %476 = vmatprep.subr.mxu0 0.0
      %477 = vmatpush1.msra.mxu0 0.0
      %478 = vmatprep.subr.mxu0 0.0
      %479 = vmatpush1.msra.mxu0 0.0
      %480 = vmatprep.subr.mxu0 0.0
      %481 = vmatpush1.msra.mxu0 0.0
      %482 = vmatprep.subr.mxu0 0.0
      %483 = vmatpush1.msra.mxu0 0.0
      %484 = vmatprep.subr.mxu0 0.0
      %485 = vmatpush1.msra.mxu0 0.0
      %486 = vmatprep.subr.mxu0 0.0
      %487 = vmatpush1.msra.mxu0 0.0
      %488 = vmatprep.subr.mxu0 0.0
      %489 = vmatpush1.msra.mxu0 0.0
      %490 = vmatprep.subr.mxu0 0.0
      %491 = vmatpush1.msra.mxu0 0.0
      %492 = vmatprep.subr.mxu0 0.0
      %493 = vmatpush1.msra.mxu0 0.0
      %494 = vmatprep.subr.mxu0 0.0
      %495 = vmatpush1.msra.mxu0 0.0
      %496 = vmatprep.subr.mxu0 0.0
      %497 = vmatpush1.msra.mxu0 0.0
      %498 = vmatprep.subr.mxu0 0.0
      %499 = vmatpush1.msra.mxu0 0.0
      %500 = vmatprep.subr.mxu0 0.0
      %501 = vmatpush1.msra.mxu0 0.0
      %502 = vmatprep.mubr.f32.mxu0 0.0
      %503 = vmatmul.mubr.f32.gmra.mrb[0].mxu0 %v427
      %v504 = vpop.f32.mrb[0].mxu0
      %v505 = vadd.f32 %v408, %v504
      %v506 = vpop.f32.mrb[0].mxu0
      %507 = vmatprep.mubr.f32.mxu0 0.0
      %508 = vmatmul.mubr.f32.gmra.mrb[0].mxu0 %v430
      %v509 = vpop.f32.mrb[0].mxu0
      %v510 = vadd.f32 %v413, %v509
      %v511 = vpop.f32.mrb[0].mxu0
      %512 = vmatprep.mubr.f32.mxu0 0.0
      %513 = vmatmul.mubr.f32.gmra.mrb[0].mxu0 %v433
      %v514 = vpop.f32.mrb[0].mxu0
      %v515 = vadd.f32 %v418, %v514
      %v516 = vpop.f32.mrb[0].mxu0
      %517 = vmatprep.mubr.f32.mxu0 0.0
      %518 = vmatmul.mubr.f32.gmra.mrb[0].mxu0 %v436
      %v519 = vpop.f32.mrb[0].mxu0
      %v520 = vadd.f32 %v423, %v519
      %v521 = vpop.f32.mrb[0].mxu0
      %522 = vdwg.mxu0
      %v523 = vmax.f32 %v505, 0.0
      %v524 = vmax.f32 %v510, 0.0
      %v525 = vmax.f32 %v515, 0.0
      %v526 = vmax.f32 %v520, 0.0
      %v527 = vadd.f32 %v365, %v523
      %v528 = vadd.f32 %v366, %v524
      %v529 = vadd.f32 %v367, %v525
      %v530 = vadd.f32 %v368, %v526
      %vm531 = vcmp.ge.s32.totalorder %v370, 4
      %532 = vrot.lane.b32.xlu0 %v527, 4
      %v533 = vpop.permute.xlu0 %532
      %534 = vrot.lane.b32.xlu0 %v528, 4
      %v535 = vpop.permute.xlu0 %534
      %536 = vrot.lane.b32.xlu0 %v529, 4
      %v537 = vpop.permute.xlu0 %536
      %538 = vrot.lane.b32.xlu0 %v530, 4
      %v539 = vpop.permute.xlu0 %538
      %v540 = vsel %vm531, %v533, 0.0
      %v541 = vsel %vm531, %v535, 0.0
      %v542 = vsel %vm531, %v537, 0.0
      %v543 = vsel %vm531, %v539, 0.0
      %vm544 = vcmp.lt.s32.totalorder %v370, 124
      %545 = vrot.lane.b32.xlu0 %v527, 124
      %v546 = vpop.permute.xlu0 %545
      %547 = vrot.lane.b32.xlu0 %v528, 124
      %v548 = vpop.permute.xlu0 %547
      %549 = vrot.lane.b32.xlu0 %v529, 124
      %v550 = vpop.permute.xlu0 %549
      %551 = vrot.lane.b32.xlu0 %v530, 124
      %v552 = vpop.permute.xlu0 %551
      %v553 = vsel %vm544, %v546, 0.0
      %v554 = vsel %vm544, %v548, 0.0
      %v555 = vsel %vm544, %v550, 0.0
      %v556 = vsel %vm544, %v552, 0.0
      %s557 = scalar_lea.vmem %s2, 32
      %v558 = vld [vmem:[%s557] sm:$0xff]
      %v559 = vld [vmem:[%s557 + $0x8] sm:$0xff]
      %v560 = vld [vmem:[%s557 + $0x10] sm:$0xff]
      %v561 = vld [vmem:[%s557 + $0x18] sm:$0xff]
      %s562 = scalar_lea.vmem %s3, 32
      %v563 = vld [vmem:[%s562] sm:$0xff]
      %v564 = vld [vmem:[%s562 + $0x8] sm:$0xff]
      %v565 = vld [vmem:[%s562 + $0x10] sm:$0xff]
      %v566 = vld [vmem:[%s562 + $0x18] sm:$0xff]
      %568 = vset.pattern.permute.xlu0 0
      %569 = vperm.xlu0 %568, %v563
      %v570 = vpop.permute.xlu0 %569
      %573 = vset.pattern.permute.xlu0 0
      %574 = vperm.xlu0 %573, %v564
      %v575 = vpop.permute.xlu0 %574
      %578 = vset.pattern.permute.xlu0 0
      %579 = vperm.xlu0 %578, %v565
      %v580 = vpop.permute.xlu0 %579
      %583 = vset.pattern.permute.xlu0 0
      %584 = vperm.xlu0 %583, %v566
      %v585 = vpop.permute.xlu0 %584
      %v588 = vsel %vm425, %v558, 0
      %v591 = vsel %vm425, %v559, 0
      %v594 = vsel %vm425, %v560, 0
      %v597 = vsel %vm425, %v561, 0
      %599 = vmatprep.subr.mxu0 0.0
      %600 = vmatpush1.msra.mxu0 %v540
      %601 = vmatprep.subr.mxu0 0.0
      %602 = vmatpush1.msra.mxu0 %v541
      %603 = vmatprep.subr.mxu0 0.0
      %604 = vmatpush1.msra.mxu0 %v542
      %605 = vmatprep.subr.mxu0 0.0
      %606 = vmatpush1.msra.mxu0 %v543
      %607 = vmatprep.subr.mxu0 0.0
      %608 = vmatpush1.msra.mxu0 %v527
      %609 = vmatprep.subr.mxu0 0.0
      %610 = vmatpush1.msra.mxu0 %v528
      %611 = vmatprep.subr.mxu0 0.0
      %612 = vmatpush1.msra.mxu0 %v529
      %613 = vmatprep.subr.mxu0 0.0
      %614 = vmatpush1.msra.mxu0 %v530
      %615 = vmatprep.subr.mxu0 0.0
      %616 = vmatpush1.msra.mxu0 %v553
      %617 = vmatprep.subr.mxu0 0.0
      %618 = vmatpush1.msra.mxu0 %v554
      %619 = vmatprep.subr.mxu0 0.0
      %620 = vmatpush1.msra.mxu0 %v555
      %621 = vmatprep.subr.mxu0 0.0
      %622 = vmatpush1.msra.mxu0 %v556
      %623 = vmatprep.subr.mxu0 0.0
      %624 = vmatpush1.msra.mxu0 0.0
      %625 = vmatprep.subr.mxu0 0.0
      %626 = vmatpush1.msra.mxu0 0.0
      %627 = vmatprep.subr.mxu0 0.0
      %628 = vmatpush1.msra.mxu0 0.0
      %629 = vmatprep.subr.mxu0 0.0
      %630 = vmatpush1.msra.mxu0 0.0
      %631 = vmatprep.subr.mxu0 0.0
      %632 = vmatpush1.msra.mxu0 0.0
      %633 = vmatprep.subr.mxu0 0.0
      %634 = vmatpush1.msra.mxu0 0.0
      %635 = vmatprep.subr.mxu0 0.0
      %636 = vmatpush1.msra.mxu0 0.0
      %637 = vmatprep.subr.mxu0 0.0
      %638 = vmatpush1.msra.mxu0 0.0
      %639 = vmatprep.subr.mxu0 0.0
      %640 = vmatpush1.msra.mxu0 0.0
      %641 = vmatprep.subr.mxu0 0.0
      %642 = vmatpush1.msra.mxu0 0.0
      %643 = vmatprep.subr.mxu0 0.0
      %644 = vmatpush1.msra.mxu0 0.0
      %645 = vmatprep.subr.mxu0 0.0
      %646 = vmatpush1.msra.mxu0 0.0
      %647 = vmatprep.subr.mxu0 0.0
      %648 = vmatpush1.msra.mxu0 0.0
      %649 = vmatprep.subr.mxu0 0.0
      %650 = vmatpush1.msra.mxu0 0.0
      %651 = vmatprep.subr.mxu0 0.0
      %652 = vmatpush1.msra.mxu0 0.0
      %653 = vmatprep.subr.mxu0 0.0
      %654 = vmatpush1.msra.mxu0 0.0
      %655 = vmatprep.subr.mxu0 0.0
      %656 = vmatpush1.msra.mxu0 0.0
      %657 = vmatprep.subr.mxu0 0.0
      %658 = vmatpush1.msra.mxu0 0.0
      %659 = vmatprep.subr.mxu0 0.0
      %660 = vmatpush1.msra.mxu0 0.0
      %661 = vmatprep.subr.mxu0 0.0
      %662 = vmatpush1.msra.mxu0 0.0
      %663 = vmatprep.mubr.f32.mxu0 0.0
      %664 = vmatmul.mubr.f32.gmra.mrb[0].mxu0 %v588
      %v665 = vpop.f32.mrb[0].mxu0
      %v666 = vadd.f32 %v570, %v665
      %v667 = vpop.f32.mrb[0].mxu0
      %668 = vmatprep.mubr.f32.mxu0 0.0
      %669 = vmatmul.mubr.f32.gmra.mrb[0].mxu0 %v591
      %v670 = vpop.f32.mrb[0].mxu0
      %v671 = vadd.f32 %v575, %v670
      %v672 = vpop.f32.mrb[0].mxu0
      %673 = vmatprep.mubr.f32.mxu0 0.0
      %674 = vmatmul.mubr.f32.gmra.mrb[0].mxu0 %v594
      %v675 = vpop.f32.mrb[0].mxu0
      %v676 = vadd.f32 %v580, %v675
      %v677 = vpop.f32.mrb[0].mxu0
      %678 = vmatprep.mubr.f32.mxu0 0.0
      %679 = vmatmul.mubr.f32.gmra.mrb[0].mxu0 %v597
      %v680 = vpop.f32.mrb[0].mxu0
      %v681 = vadd.f32 %v585, %v680
      %v682 = vpop.f32.mrb[0].mxu0
      %683 = vdwg.mxu0
      %v684 = vmax.f32 %v666, 0.0
      %v685 = vmax.f32 %v671, 0.0
      %v686 = vmax.f32 %v676, 0.0
      %v687 = vmax.f32 %v681, 0.0
      %v688 = vadd.f32 %v527, %v684
      %v689 = vadd.f32 %v528, %v685
      %v690 = vadd.f32 %v529, %v686
      %v691 = vadd.f32 %v530, %v687
      %vm692 = vcmp.ge.s32.totalorder %v370, 8
      %693 = vrot.lane.b32.xlu0 %v688, 8
      %v694 = vpop.permute.xlu0 %693
      %695 = vrot.lane.b32.xlu0 %v689, 8
      %v696 = vpop.permute.xlu0 %695
      %697 = vrot.lane.b32.xlu0 %v690, 8
      %v698 = vpop.permute.xlu0 %697
      %699 = vrot.lane.b32.xlu0 %v691, 8
      %v700 = vpop.permute.xlu0 %699
      %v701 = vsel %vm692, %v694, 0.0
      %v702 = vsel %vm692, %v696, 0.0
      %v703 = vsel %vm692, %v698, 0.0
      %v704 = vsel %vm692, %v700, 0.0
      %vm705 = vcmp.lt.s32.totalorder %v370, 120
      %706 = vrot.lane.b32.xlu0 %v688, 120
      %v707 = vpop.permute.xlu0 %706
      %708 = vrot.lane.b32.xlu0 %v689, 120
      %v709 = vpop.permute.xlu0 %708
      %710 = vrot.lane.b32.xlu0 %v690, 120
      %v711 = vpop.permute.xlu0 %710
      %712 = vrot.lane.b32.xlu0 %v691, 120
      %v713 = vpop.permute.xlu0 %712
      %v714 = vsel %vm705, %v707, 0.0
      %v715 = vsel %vm705, %v709, 0.0
      %v716 = vsel %vm705, %v711, 0.0
      %v717 = vsel %vm705, %v713, 0.0
      %s718 = scalar_lea.vmem %s2, 64
      %v719 = vld [vmem:[%s718] sm:$0xff]
      %v720 = vld [vmem:[%s718 + $0x8] sm:$0xff]
      %v721 = vld [vmem:[%s718 + $0x10] sm:$0xff]
      %v722 = vld [vmem:[%s718 + $0x18] sm:$0xff]
      %s723 = scalar_lea.vmem %s3, 64
      %v724 = vld [vmem:[%s723] sm:$0xff]
      %v725 = vld [vmem:[%s723 + $0x8] sm:$0xff]
      %v726 = vld [vmem:[%s723 + $0x10] sm:$0xff]
      %v727 = vld [vmem:[%s723 + $0x18] sm:$0xff]
      %729 = vset.pattern.permute.xlu0 0
      %730 = vperm.xlu0 %729, %v724
      %v731 = vpop.permute.xlu0 %730
      %734 = vset.pattern.permute.xlu0 0
      %735 = vperm.xlu0 %734, %v725
      %v736 = vpop.permute.xlu0 %735
      %739 = vset.pattern.permute.xlu0 0
      %740 = vperm.xlu0 %739, %v726
      %v741 = vpop.permute.xlu0 %740
      %744 = vset.pattern.permute.xlu0 0
      %745 = vperm.xlu0 %744, %v727
      %v746 = vpop.permute.xlu0 %745
      %v749 = vsel %vm425, %v719, 0
      %v752 = vsel %vm425, %v720, 0
      %v755 = vsel %vm425, %v721, 0
      %v758 = vsel %vm425, %v722, 0
      %760 = vmatprep.subr.mxu0 0.0
      %761 = vmatpush1.msra.mxu0 %v701
      %762 = vmatprep.subr.mxu0 0.0
      %763 = vmatpush1.msra.mxu0 %v702
      %764 = vmatprep.subr.mxu0 0.0
      %765 = vmatpush1.msra.mxu0 %v703
      %766 = vmatprep.subr.mxu0 0.0
      %767 = vmatpush1.msra.mxu0 %v704
      %768 = vmatprep.subr.mxu0 0.0
      %769 = vmatpush1.msra.mxu0 %v688
      %770 = vmatprep.subr.mxu0 0.0
      %771 = vmatpush1.msra.mxu0 %v689
      %772 = vmatprep.subr.mxu0 0.0
      %773 = vmatpush1.msra.mxu0 %v690
      %774 = vmatprep.subr.mxu0 0.0
      %775 = vmatpush1.msra.mxu0 %v691
      %776 = vmatprep.subr.mxu0 0.0
      %777 = vmatpush1.msra.mxu0 %v714
      %778 = vmatprep.subr.mxu0 0.0
      %779 = vmatpush1.msra.mxu0 %v715
      %780 = vmatprep.subr.mxu0 0.0
      %781 = vmatpush1.msra.mxu0 %v716
      %782 = vmatprep.subr.mxu0 0.0
      %783 = vmatpush1.msra.mxu0 %v717
      %784 = vmatprep.subr.mxu0 0.0
      %785 = vmatpush1.msra.mxu0 0.0
      %786 = vmatprep.subr.mxu0 0.0
      %787 = vmatpush1.msra.mxu0 0.0
      %788 = vmatprep.subr.mxu0 0.0
      %789 = vmatpush1.msra.mxu0 0.0
      %790 = vmatprep.subr.mxu0 0.0
      %791 = vmatpush1.msra.mxu0 0.0
      %792 = vmatprep.subr.mxu0 0.0
      %793 = vmatpush1.msra.mxu0 0.0
      %794 = vmatprep.subr.mxu0 0.0
      %795 = vmatpush1.msra.mxu0 0.0
      %796 = vmatprep.subr.mxu0 0.0
      %797 = vmatpush1.msra.mxu0 0.0
      %798 = vmatprep.subr.mxu0 0.0
      %799 = vmatpush1.msra.mxu0 0.0
      %800 = vmatprep.subr.mxu0 0.0
      %801 = vmatpush1.msra.mxu0 0.0
      %802 = vmatprep.subr.mxu0 0.0
      %803 = vmatpush1.msra.mxu0 0.0
      %804 = vmatprep.subr.mxu0 0.0
      %805 = vmatpush1.msra.mxu0 0.0
      %806 = vmatprep.subr.mxu0 0.0
      %807 = vmatpush1.msra.mxu0 0.0
      %808 = vmatprep.subr.mxu0 0.0
      %809 = vmatpush1.msra.mxu0 0.0
      %810 = vmatprep.subr.mxu0 0.0
      %811 = vmatpush1.msra.mxu0 0.0
      %812 = vmatprep.subr.mxu0 0.0
      %813 = vmatpush1.msra.mxu0 0.0
      %814 = vmatprep.subr.mxu0 0.0
      %815 = vmatpush1.msra.mxu0 0.0
      %816 = vmatprep.subr.mxu0 0.0
      %817 = vmatpush1.msra.mxu0 0.0
      %818 = vmatprep.subr.mxu0 0.0
      %819 = vmatpush1.msra.mxu0 0.0
      %820 = vmatprep.subr.mxu0 0.0
      %821 = vmatpush1.msra.mxu0 0.0
      %822 = vmatprep.subr.mxu0 0.0
      %823 = vmatpush1.msra.mxu0 0.0
      %824 = vmatprep.mubr.f32.mxu0 0.0
      %825 = vmatmul.mubr.f32.gmra.mrb[0].mxu0 %v749
      %v826 = vpop.f32.mrb[0].mxu0
      %v827 = vadd.f32 %v731, %v826
      %v828 = vpop.f32.mrb[0].mxu0
      %829 = vmatprep.mubr.f32.mxu0 0.0
      %830 = vmatmul.mubr.f32.gmra.mrb[0].mxu0 %v752
      %v831 = vpop.f32.mrb[0].mxu0
      %v832 = vadd.f32 %v736, %v831
      %v833 = vpop.f32.mrb[0].mxu0
      %834 = vmatprep.mubr.f32.mxu0 0.0
      %835 = vmatmul.mubr.f32.gmra.mrb[0].mxu0 %v755
      %v836 = vpop.f32.mrb[0].mxu0
      %v837 = vadd.f32 %v741, %v836
      %v838 = vpop.f32.mrb[0].mxu0
      %839 = vmatprep.mubr.f32.mxu0 0.0
      %840 = vmatmul.mubr.f32.gmra.mrb[0].mxu0 %v758
      %v841 = vpop.f32.mrb[0].mxu0
      %v842 = vadd.f32 %v746, %v841
      %v843 = vpop.f32.mrb[0].mxu0
      %844 = vdwg.mxu0
      %v845 = vmax.f32 %v827, 0.0
      %v846 = vmax.f32 %v832, 0.0
      %v847 = vmax.f32 %v837, 0.0
      %v848 = vmax.f32 %v842, 0.0
      %v849 = vadd.f32 %v688, %v845
      %v850 = vadd.f32 %v689, %v846
      %v851 = vadd.f32 %v690, %v847
      %v852 = vadd.f32 %v691, %v848
      %vm853 = vcmp.ge.s32.totalorder %v370, 16
      %854 = vrot.lane.b32.xlu0 %v849, 16
      %v855 = vpop.permute.xlu0 %854
      %856 = vrot.lane.b32.xlu0 %v850, 16
      %v857 = vpop.permute.xlu0 %856
      %858 = vrot.lane.b32.xlu0 %v851, 16
      %v859 = vpop.permute.xlu0 %858
      %860 = vrot.lane.b32.xlu0 %v852, 16
      %v861 = vpop.permute.xlu0 %860
      %v862 = vsel %vm853, %v855, 0.0
      %v863 = vsel %vm853, %v857, 0.0
      %v864 = vsel %vm853, %v859, 0.0
      %v865 = vsel %vm853, %v861, 0.0
      %vm866 = vcmp.lt.s32.totalorder %v370, 112
      %867 = vrot.lane.b32.xlu0 %v849, 112
      %v868 = vpop.permute.xlu0 %867
      %869 = vrot.lane.b32.xlu0 %v850, 112
      %v870 = vpop.permute.xlu0 %869
      %871 = vrot.lane.b32.xlu0 %v851, 112
      %v872 = vpop.permute.xlu0 %871
      %873 = vrot.lane.b32.xlu0 %v852, 112
      %v874 = vpop.permute.xlu0 %873
      %v875 = vsel %vm866, %v868, 0.0
      %v876 = vsel %vm866, %v870, 0.0
      %v877 = vsel %vm866, %v872, 0.0
      %v878 = vsel %vm866, %v874, 0.0
      %s879 = scalar_lea.vmem %s2, 96
      %v880 = vld [vmem:[%s879] sm:$0xff]
      %v881 = vld [vmem:[%s879 + $0x8] sm:$0xff]
      %v882 = vld [vmem:[%s879 + $0x10] sm:$0xff]
      %v883 = vld [vmem:[%s879 + $0x18] sm:$0xff]
      %s884 = scalar_lea.vmem %s3, 96
      %v885 = vld [vmem:[%s884] sm:$0xff]
      %v886 = vld [vmem:[%s884 + $0x8] sm:$0xff]
      %v887 = vld [vmem:[%s884 + $0x10] sm:$0xff]
      %v888 = vld [vmem:[%s884 + $0x18] sm:$0xff]
      %890 = vset.pattern.permute.xlu0 0
      %891 = vperm.xlu0 %890, %v885
      %v892 = vpop.permute.xlu0 %891
      %895 = vset.pattern.permute.xlu0 0
      %896 = vperm.xlu0 %895, %v886
      %v897 = vpop.permute.xlu0 %896
      %900 = vset.pattern.permute.xlu0 0
      %901 = vperm.xlu0 %900, %v887
      %v902 = vpop.permute.xlu0 %901
      %905 = vset.pattern.permute.xlu0 0
      %906 = vperm.xlu0 %905, %v888
      %v907 = vpop.permute.xlu0 %906
      %v910 = vsel %vm425, %v880, 0
      %v913 = vsel %vm425, %v881, 0
      %v916 = vsel %vm425, %v882, 0
      %v919 = vsel %vm425, %v883, 0
      %921 = vmatprep.subr.mxu0 0.0
      %922 = vmatpush1.msra.mxu0 %v862
      %923 = vmatprep.subr.mxu0 0.0
      %924 = vmatpush1.msra.mxu0 %v863
      %925 = vmatprep.subr.mxu0 0.0
      %926 = vmatpush1.msra.mxu0 %v864
      %927 = vmatprep.subr.mxu0 0.0
      %928 = vmatpush1.msra.mxu0 %v865
      %929 = vmatprep.subr.mxu0 0.0
      %930 = vmatpush1.msra.mxu0 %v849
      %931 = vmatprep.subr.mxu0 0.0
      %932 = vmatpush1.msra.mxu0 %v850
      %933 = vmatprep.subr.mxu0 0.0
      %934 = vmatpush1.msra.mxu0 %v851
      %935 = vmatprep.subr.mxu0 0.0
      %936 = vmatpush1.msra.mxu0 %v852
      %937 = vmatprep.subr.mxu0 0.0
      %938 = vmatpush1.msra.mxu0 %v875
      %939 = vmatprep.subr.mxu0 0.0
      %940 = vmatpush1.msra.mxu0 %v876
      %941 = vmatprep.subr.mxu0 0.0
      %942 = vmatpush1.msra.mxu0 %v877
      %943 = vmatprep.subr.mxu0 0.0
      %944 = vmatpush1.msra.mxu0 %v878
      %945 = vmatprep.subr.mxu0 0.0
      %946 = vmatpush1.msra.mxu0 0.0
      %947 = vmatprep.subr.mxu0 0.0
      %948 = vmatpush1.msra.mxu0 0.0
      %949 = vmatprep.subr.mxu0 0.0
      %950 = vmatpush1.msra.mxu0 0.0
      %951 = vmatprep.subr.mxu0 0.0
      %952 = vmatpush1.msra.mxu0 0.0
      %953 = vmatprep.subr.mxu0 0.0
      %954 = vmatpush1.msra.mxu0 0.0
      %955 = vmatprep.subr.mxu0 0.0
      %956 = vmatpush1.msra.mxu0 0.0
      %957 = vmatprep.subr.mxu0 0.0
      %958 = vmatpush1.msra.mxu0 0.0
      %959 = vmatprep.subr.mxu0 0.0
      %960 = vmatpush1.msra.mxu0 0.0
      %961 = vmatprep.subr.mxu0 0.0
      %962 = vmatpush1.msra.mxu0 0.0
      %963 = vmatprep.subr.mxu0 0.0
      %964 = vmatpush1.msra.mxu0 0.0
      %965 = vmatprep.subr.mxu0 0.0
      %966 = vmatpush1.msra.mxu0 0.0
      %967 = vmatprep.subr.mxu0 0.0
      %968 = vmatpush1.msra.mxu0 0.0
      %969 = vmatprep.subr.mxu0 0.0
      %970 = vmatpush1.msra.mxu0 0.0
      %971 = vmatprep.subr.mxu0 0.0
      %972 = vmatpush1.msra.mxu0 0.0
      %973 = vmatprep.subr.mxu0 0.0
      %974 = vmatpush1.msra.mxu0 0.0
      %975 = vmatprep.subr.mxu0 0.0
      %976 = vmatpush1.msra.mxu0 0.0
      %977 = vmatprep.subr.mxu0 0.0
      %978 = vmatpush1.msra.mxu0 0.0
      %979 = vmatprep.subr.mxu0 0.0
      %980 = vmatpush1.msra.mxu0 0.0
      %981 = vmatprep.subr.mxu0 0.0
      %982 = vmatpush1.msra.mxu0 0.0
      %983 = vmatprep.subr.mxu0 0.0
      %984 = vmatpush1.msra.mxu0 0.0
      %985 = vmatprep.mubr.f32.mxu0 0.0
      %986 = vmatmul.mubr.f32.gmra.mrb[0].mxu0 %v910
      %v987 = vpop.f32.mrb[0].mxu0
      %v988 = vadd.f32 %v892, %v987
      %v989 = vpop.f32.mrb[0].mxu0
      %990 = vmatprep.mubr.f32.mxu0 0.0
      %991 = vmatmul.mubr.f32.gmra.mrb[0].mxu0 %v913
      %v992 = vpop.f32.mrb[0].mxu0
      %v993 = vadd.f32 %v897, %v992
      %v994 = vpop.f32.mrb[0].mxu0
      %995 = vmatprep.mubr.f32.mxu0 0.0
      %996 = vmatmul.mubr.f32.gmra.mrb[0].mxu0 %v916
      %v997 = vpop.f32.mrb[0].mxu0
      %v998 = vadd.f32 %v902, %v997
      %v999 = vpop.f32.mrb[0].mxu0
      %1000 = vmatprep.mubr.f32.mxu0 0.0
      %1001 = vmatmul.mubr.f32.gmra.mrb[0].mxu0 %v919
      %v1002 = vpop.f32.mrb[0].mxu0
      %v1003 = vadd.f32 %v907, %v1002
      %v1004 = vpop.f32.mrb[0].mxu0
      %1005 = vdwg.mxu0
      %v1006 = vmax.f32 %v988, 0.0
      %v1007 = vmax.f32 %v993, 0.0
      %v1008 = vmax.f32 %v998, 0.0
      %v1009 = vmax.f32 %v1003, 0.0
      %v1010 = vadd.f32 %v849, %v1006
      %v1011 = vadd.f32 %v850, %v1007
      %v1012 = vadd.f32 %v851, %v1008
      %v1013 = vadd.f32 %v852, %v1009
      %v1014 = vld [vmem:[%s4] sm:$0xff]
      %v1015 = vld [vmem:[%s4 + $0x8] sm:$0xff]
      %v1016 = vld [vmem:[%s4 + $0x10] sm:$0xff]
      %v1017 = vld [vmem:[%s4 + $0x18] sm:$0xff]
      %v1018 = vmul.f32 %v1010, %v1014
      %v1019 = vmul.f32 %v1011, %v1015
      %v1020 = vmul.f32 %v1012, %v1016
      %v1021 = vmul.f32 %v1013, %v1017
      %1022 = vadd.xlane.f32.xlu0 %v1018
      %v1023 = vpop.xlane.xlu0 %1022
      %1024 = vadd.xlane.f32.xlu0 %v1019
      %v1025 = vpop.xlane.xlu0 %1024
      %1026 = vadd.xlane.f32.xlu0 %v1020
      %v1027 = vpop.xlane.xlu0 %1026
      %1028 = vadd.xlane.f32.xlu0 %v1021
      %v1029 = vpop.xlane.xlu0 %1028
      %v1030 = vadd.f32 %v1023, %v1025
      %v1031 = vadd.f32 %v1030, %v1027
      %v1032 = vadd.f32 %v1031, %v1029
      %v1033 = vrot.slane %v1032, 4
      %v1034 = vadd.f32 %v1032, %v1033
      %v1035 = vrot.slane %v1034, 2
      %v1036 = vadd.f32 %v1034, %v1035
      %v1037 = vrot.slane %v1036, 1
      %v1038 = vadd.f32 %v1036, %v1037
      %v1039 = vld [vmem:[#allocation2] sm:$0x1]
      %v1040 = vadd.f32 %v1038, %v1039
      %v1042 = vlaneseq
      %v1043 = vshrl.u32 %v1042, 7
      %v1044 = vsub.s32 0, %v1043
      %v1045 = vrot.slane %v1040, %v1044
      %1046 = vset.pattern.permute.xlu0 0
      %1047 = vperm.xlu0 %1046, %v1045
      %v1048 = vpop.permute.xlu0 %1047
      %1050 = vst [vmem:[%s251] sm:$0xff] %v1048
      %p1051 = scmp.lt.s32.totalorder %s19, 1
      %s1052 = scalar_select %p1051, %s19, 1
      %s1053 = smul.addr %s1052, 8
      %s1054 = scalar_lea.vmem %s6, %s1053
      // Predicated region
      $region45: #{count_wrapper_forward.1} parent=43 // pred_check
        %p1055 = pneg %p168
      $region46: #{count_wrapper_forward.1} parent=43 // pred_check_branch
        %1057 = sbr.rel (%p1055) target = $region48
      $region47: #{count_wrapper_forward.1} parent=43 // pred_region
        _
      $region48: #{count_wrapper_forward.1} parent=43 // pred_fallthru
        _
    $region44: #{count_wrapper_forward.1} parent=5 // pred_fallthru
      _
    %p1058 = scmp.le.s32.totalorder 2, %s14
    // Predicated region
    $region49: #{count_wrapper_forward.1} parent=5 // pred_check
      %p1059 = pneg %p1058
    $region50: #{count_wrapper_forward.1} parent=5 // pred_check_branch
      %1061 = sbr.rel (%p1059) target = $region52
    $region51: #{count_wrapper_forward.1} parent=5 // pred_region
      %s1062 = ssub.s32 %s14, 2
      // Predicated region
      $region53: #{count_wrapper_forward.1} parent=51 // pred_check
        %p1063 = pneg %p174
      $region54: #{count_wrapper_forward.1} parent=51 // pred_check_branch
        %1065 = sbr.rel (%p1063) target = $region56
      $region55: #{count_wrapper_forward.1} parent=51 // pred_region
        %p1066 = scmp.lt.s32.totalorder %s20, 1
        %s1067 = scalar_select %p1066, %s20, 1
        %s1068 = smul.addr %s1067, 8
        %s1069 = scalar_lea.vmem %s6, %s1068
      $region56: #{count_wrapper_forward.1} parent=51 // pred_fallthru
        _
    $region52: #{count_wrapper_forward.1} parent=5 // pred_fallthru
      _
  $region6: #{count_wrapper_forward.1} parent=0 // loop_footer
    %s18 = sadd.s32 1, %s14
  $region7: #{count_wrapper_forward.1} parent=0 // loop_footer_branch
    %13 = sbr.rel target = $region3
  $region8: #{count_wrapper_forward.1} parent=0 // loop_exit
    _

</llo_original>
